<compile_context>
chip_gen: v7x
topology: tpu7x:2x2x1
jax: 0.10.0
libtpu: 0.0.40
codegen_flags: <defaults>
</compile_context>

<pallas_src>
import jax
import jax.numpy as jnp
from jax.experimental import pallas as pl
from jax.experimental.pallas import tpu as pltpu


def _mlp_kernel(x_ref, w1_ref, b1_ref, w2_ref, b2_ref, w3_ref, b3_ref, o_ref):
    """One batch tile, batch on lanes / features on sublanes.

      x_ref : (D, TB)  f32   input slab (x^T), lane-dense
      w1_ref: (D, D)   bf16  hidden1 weight, PyTorch (out, in) layout
      b1_ref: (D, 1)   f32
      w2_ref: (8, D)   bf16  hidden2 weight, zero-padded 5 -> 8 rows
      b2_ref: (8, 1)   f32   zero-padded
      w3_ref: (8, 1)   f32   output weight as a column, zero-padded
      b3_ref: (1, 1)   f32   scalar bias (SMEM)
      o_ref : (1, TB)  f32   lane-dense sigmoid outputs
    """
    xT = x_ref[...].astype(jnp.bfloat16)                       # (D, TB)

    # hidden1 + ReLU:  h1^T = relu(W1 @ x^T + b1)   (bf16 MXU, f32 accumulate)
    h1 = jnp.dot(w1_ref[...], xT, preferred_element_type=jnp.float32)
    h1 = jnp.maximum(h1 + b1_ref[...], 0.0)                    # (D, TB) f32

    # hidden2 + ReLU:  h2^T = relu(W2 @ h1^T + b2)
    h2 = jnp.dot(w2_ref[...], h1.astype(jnp.bfloat16),
                 preferred_element_type=jnp.float32)
    h2 = jnp.maximum(h2 + b2_ref[...], 0.0)                    # (8, TB) f32

    # output + Sigmoid: tiny 5->1 head on the VPU/XLU (sublane reduce); padded
    # rows contribute 0.  Result is naturally lane-dense (1, TB).
    z = jnp.sum(h2 * w3_ref[...], axis=0, keepdims=True) + b3_ref[0, 0]
    o_ref[...] = jax.nn.sigmoid(z)                             # EUP logistic


def neural_network_plain_forward(x, params, *, block_b=256):
    """x: (B, D) float32, params in native PyTorch layout (W: (out, in), b: (out,)).
    Returns a flat (B,) array, matching x_out.flatten() of the PyTorch module."""
    assert block_b % 128 == 0, "batch tile must be lane-dense (multiple of 128)"
    B, D = x.shape
    grid = pl.cdiv(B, block_b)
    b_pad = grid * block_b

    # Lane-dense input slab: batch on lanes (pad batch up to the tile boundary).
    xT = jnp.zeros((D, b_pad), jnp.float32).at[:, :B].set(x.T.astype(jnp.float32))

    # Weights: bf16 for the MXU; tiny tail layer padded from 5 to 8 sublanes.
    w1 = params["W1"].astype(jnp.bfloat16)                                   # (D, D)
    b1 = params["b1"].reshape(D, 1).astype(jnp.float32)                      # (D, 1)
    w2 = jnp.zeros((8, D), jnp.bfloat16).at[:5, :].set(
        params["W2"].astype(jnp.bfloat16))                                   # (8, D)
    b2 = jnp.zeros((8, 1), jnp.float32).at[:5, 0].set(
        params["b2"].astype(jnp.float32))                                    # (8, 1)
    w3 = jnp.zeros((8, 1), jnp.float32).at[:5, 0].set(
        params["W3"].reshape(5).astype(jnp.float32))                         # (8, 1)
    b3 = params["b3"].reshape(1, 1).astype(jnp.float32)                      # (1, 1)

    out = pl.pallas_call(
        _mlp_kernel,
        out_shape=jax.ShapeDtypeStruct((1, b_pad), jnp.float32),
        grid=(grid,),
        in_specs=[
            pl.BlockSpec((D, block_b), lambda i: (0, i)),       # x^T tile (pipelined)
            pl.BlockSpec((D, D), lambda i: (0, 0)),             # W1 (VMEM-resident)
            pl.BlockSpec((D, 1), lambda i: (0, 0)),             # b1
            pl.BlockSpec((8, D), lambda i: (0, 0)),             # W2
            pl.BlockSpec((8, 1), lambda i: (0, 0)),             # b2
            pl.BlockSpec((8, 1), lambda i: (0, 0)),             # W3 column
            pl.BlockSpec(memory_space=pltpu.MemorySpace.SMEM),  # b3 scalar
        ],
        out_specs=pl.BlockSpec((1, block_b), lambda i: (0, i)),
        compiler_params=pltpu.CompilerParams(
            dimension_semantics=("parallel",)),                 # v7x: 2 TCs share batch
    )(xT, w1, b1, w2, b2, w3, b3)

    return out.reshape(-1)[:B]                                  # flatten -> (B,)


def init_params(key, N):
    """PyTorch nn.Linear default init, native (out_features, in_features) layout."""
    D = N * (N + 1)

    def linear(key, fan_in, fan_out):
        kw, kb = jax.random.split(key)
        bound = 1.0 / jnp.sqrt(jnp.float32(fan_in))
        w = jax.random.uniform(kw, (fan_out, fan_in), jnp.float32, -bound, bound)
        b = jax.random.uniform(kb, (fan_out,), jnp.float32, -bound, bound)
        return w, b

    k1, k2, k3 = jax.random.split(key, 3)
    W1, b1 = linear(k1, D, D)
    W2, b2 = linear(k2, D, 5)
    W3, b3 = linear(k3, 5, 1)
    return {"W1": W1, "b1": b1, "W2": W2, "b2": b2, "W3": W3, "b3": b3}


if __name__ == "__main__":
    N = 7                       # module parameter -> feature dim D = N*(N+1) = 56
    D = N * (N + 1)
    B = 1024                    # batch; tiled into 4 grid steps of 256

    key = jax.random.PRNGKey(0)
    k_x, k_p = jax.random.split(key)
    x = jax.random.normal(k_x, (B, D), dtype=jnp.float32)
    params = init_params(k_p, N)

    y = neural_network_plain_forward(x, params, block_b=256)
    jax.block_until_ready(y)

    # pure-JAX f32 reference (PyTorch semantics: y = x @ W.T + b)
    hp = jax.lax.Precision.HIGHEST
    ref = jnp.maximum(jnp.dot(x, params["W1"].T, precision=hp) + params["b1"], 0.0)
    ref = jnp.maximum(jnp.dot(ref, params["W2"].T, precision=hp) + params["b2"], 0.0)
    ref = jax.nn.sigmoid(
        jnp.dot(ref, params["W3"].T, precision=hp) + params["b3"]).reshape(-1)

    assert y.shape == (B,)
    # bf16 MXU operands (f32 accumulation) vs f32 reference -> loose tolerance.
    max_err = float(jnp.max(jnp.abs(y - ref)))
    assert jnp.allclose(y, ref, atol=3e-2, rtol=0.0), max_err

    print("KERNEL_OK")
</pallas_src>

<mosaic_0001>
module attributes {stable_mosaic.version = 11 : i64} {
  func.func @_mlp_kernel(%arg0: i32, %arg1: memref<56x256xf32, #tpu.memory_space<vmem>>, %arg2: memref<56x56xbf16, #tpu.memory_space<vmem>>, %arg3: memref<56x1xf32, #tpu.memory_space<vmem>>, %arg4: memref<8x56xbf16, #tpu.memory_space<vmem>>, %arg5: memref<8x1xf32, #tpu.memory_space<vmem>>, %arg6: memref<8x1xf32, #tpu.memory_space<vmem>>, %arg7: memref<1x1xf32, #tpu.memory_space<smem>>, %arg8: memref<1x256xf32, #tpu.memory_space<vmem>>) attributes {dimension_semantics = [#tpu.dimension_semantics<parallel>], iteration_bounds = array<i64: 4>, scalar_prefetch = 0 : i64, scratch_operands = 0 : i64, tpu.core_type = #tpu.core_type<tc>, window_params = [{transform_indices = @transform_0, window_bounds = array<i64: 56, 256>}, {pipeline_mode = #tpu.pipeline_mode<synchronous>, transform_indices = @transform_1, window_bounds = array<i64: 56, 56>}, {pipeline_mode = #tpu.pipeline_mode<synchronous>, transform_indices = @transform_2, window_bounds = array<i64: 56, 1>}, {pipeline_mode = #tpu.pipeline_mode<synchronous>, transform_indices = @transform_3, window_bounds = array<i64: 8, 56>}, {pipeline_mode = #tpu.pipeline_mode<synchronous>, transform_indices = @transform_4, window_bounds = array<i64: 8, 1>}, {pipeline_mode = #tpu.pipeline_mode<synchronous>, transform_indices = @transform_5, window_bounds = array<i64: 8, 1>}, {transform_indices = @transform_6, window_bounds = array<i64: 1, 1>}, {transform_indices = @transform_7, window_bounds = array<i64: 1, 256>}]} {
    %c0 = arith.constant 0 : index
    %c0_0 = arith.constant 0 : index
    %0 = vector.load %arg1[%c0, %c0_0] : memref<56x256xf32, #tpu.memory_space<vmem>>, vector<56x256xf32>
    %1 = arith.truncf %0 : vector<56x256xf32> to vector<56x256xbf16>
    %c0_1 = arith.constant 0 : index
    %c0_2 = arith.constant 0 : index
    %2 = vector.load %arg2[%c0_1, %c0_2] : memref<56x56xbf16, #tpu.memory_space<vmem>>, vector<56x56xbf16>
    %cst = arith.constant dense<0.000000e+00> : vector<56x256xf32>
    %3 = tpu.matmul %2, %1, %cst {dimension_numbers = #tpu.dot_dimension_numbers<[1], [0], [0], [1], [0, 0, 1, 1], [], []>} : vector<56x56xbf16>, vector<56x256xbf16>, vector<56x256xf32> -> vector<56x256xf32>
    %c0_3 = arith.constant 0 : index
    %c0_4 = arith.constant 0 : index
    %4 = vector.load %arg3[%c0_3, %c0_4] : memref<56x1xf32, #tpu.memory_space<vmem>>, vector<56x1xf32>
    %5 = vector.broadcast %4 : vector<56x1xf32> to vector<56x256xf32>
    %6 = arith.addf %3, %5 : vector<56x256xf32>
    %cst_5 = arith.constant 0.000000e+00 : f32
    %7 = vector.broadcast %cst_5 : f32 to vector<56x256xf32>
    %8 = arith.maximumf %6, %7 : vector<56x256xf32>
    %c0_6 = arith.constant 0 : index
    %c0_7 = arith.constant 0 : index
    %9 = vector.load %arg4[%c0_6, %c0_7] : memref<8x56xbf16, #tpu.memory_space<vmem>>, vector<8x56xbf16>
    %10 = arith.truncf %8 : vector<56x256xf32> to vector<56x256xbf16>
    %cst_8 = arith.constant dense<0.000000e+00> : vector<8x256xf32>
    %11 = tpu.matmul %9, %10, %cst_8 {dimension_numbers = #tpu.dot_dimension_numbers<[1], [0], [0], [1], [0, 0, 1, 1], [], []>} : vector<8x56xbf16>, vector<56x256xbf16>, vector<8x256xf32> -> vector<8x256xf32>
    %c0_9 = arith.constant 0 : index
    %c0_10 = arith.constant 0 : index
    %12 = vector.load %arg5[%c0_9, %c0_10] : memref<8x1xf32, #tpu.memory_space<vmem>>, vector<8x1xf32>
    %13 = vector.broadcast %12 : vector<8x1xf32> to vector<8x256xf32>
    %14 = arith.addf %11, %13 : vector<8x256xf32>
    %cst_11 = arith.constant 0.000000e+00 : f32
    %15 = vector.broadcast %cst_11 : f32 to vector<8x256xf32>
    %16 = arith.maximumf %14, %15 : vector<8x256xf32>
    %c0_12 = arith.constant 0 : index
    %c0_13 = arith.constant 0 : index
    %17 = vector.load %arg6[%c0_12, %c0_13] : memref<8x1xf32, #tpu.memory_space<vmem>>, vector<8x1xf32>
    %18 = vector.broadcast %17 : vector<8x1xf32> to vector<8x256xf32>
    %19 = arith.mulf %16, %18 : vector<8x256xf32>
    %cst_14 = arith.constant dense<0.000000e+00> : vector<256xf32>
    %20 = vector.multi_reduction <add>, %19, %cst_14 [0] : vector<8x256xf32> to vector<256xf32>
    %21 = vector.shape_cast %20 : vector<256xf32> to vector<1x256xf32>
    %c0_15 = arith.constant 0 : index
    %c0_16 = arith.constant 0 : index
    %22 = memref.load %arg7[%c0_15, %c0_16] : memref<1x1xf32, #tpu.memory_space<smem>>
    %23 = vector.broadcast %22 : f32 to vector<1x256xf32>
    %24 = arith.addf %21, %23 : vector<1x256xf32>
    %25 = arith.negf %24 : vector<1x256xf32>
    %26 = math.exp %25 : vector<1x256xf32>
    %cst_17 = arith.constant 1.000000e+00 : f32
    %27 = vector.broadcast %cst_17 : f32 to vector<1x256xf32>
    %28 = arith.addf %27, %26 : vector<1x256xf32>
    %29 = arith.divf %27, %28 : vector<1x256xf32>
    %c0_18 = arith.constant 0 : index
    %c0_19 = arith.constant 0 : index
    %30 = vector.load %arg8[%c0_18, %c0_19] : memref<1x256xf32, #tpu.memory_space<vmem>>, vector<1x256xf32>
    tpu.vector_store %arg8[%c0_18, %c0_19], %29 {strides = array<i32>} : memref<1x256xf32, #tpu.memory_space<vmem>>, vector<1x256xf32>,
    return
  }
  func.func @transform_0(%arg0: i32) -> (i32, i32) {
    %c0_i32 = arith.constant 0 : i32
    %c0_i32_0 = arith.constant 0 : i32
    return %c0_i32, %arg0 : i32, i32
  }
  func.func @transform_1(%arg0: i32) -> (i32, i32) {
    %c0_i32 = arith.constant 0 : i32
    %c0_i32_0 = arith.constant 0 : i32
    %c0_i32_1 = arith.constant 0 : i32
    return %c0_i32, %c0_i32_0 : i32, i32
  }
  func.func @transform_2(%arg0: i32) -> (i32, i32) {
    %c0_i32 = arith.constant 0 : i32
    %c0_i32_0 = arith.constant 0 : i32
    %c0_i32_1 = arith.constant 0 : i32
    return %c0_i32, %c0_i32_0 : i32, i32
  }
  func.func @transform_3(%arg0: i32) -> (i32, i32) {
    %c0_i32 = arith.constant 0 : i32
    %c0_i32_0 = arith.constant 0 : i32
    %c0_i32_1 = arith.constant 0 : i32
    return %c0_i32, %c0_i32_0 : i32, i32
  }
  func.func @transform_4(%arg0: i32) -> (i32, i32) {
    %c0_i32 = arith.constant 0 : i32
    %c0_i32_0 = arith.constant 0 : i32
    %c0_i32_1 = arith.constant 0 : i32
    return %c0_i32, %c0_i32_0 : i32, i32
  }
  func.func @transform_5(%arg0: i32) -> (i32, i32) {
    %c0_i32 = arith.constant 0 : i32
    %c0_i32_0 = arith.constant 0 : i32
    %c0_i32_1 = arith.constant 0 : i32
    return %c0_i32, %c0_i32_0 : i32, i32
  }
  func.func @transform_6(%arg0: i32) -> (i32, i32) {
    %c0_i32 = arith.constant 0 : i32
    %c0_i32_0 = arith.constant 0 : i32
    %c0_i32_1 = arith.constant 0 : i32
    return %c0_i32, %c0_i32_0 : i32, i32
  }
  func.func @transform_7(%arg0: i32) -> (i32, i32) {
    %c0_i32 = arith.constant 0 : i32
    %c0_i32_0 = arith.constant 0 : i32
    return %c0_i32, %arg0 : i32, i32
  }
}

</mosaic_0001>

<llo_original>
// kernel: tpu_custom_call.1
$region0: #{tpu_custom_call.1}
  #allocation0 [shape = 'u32[]', space=smem, size = 0x4, offset = 0x4, fixed_abs, tag = 'smem constant byte address 0x4 - core index']
  #allocation1 [shape = 'u32[144,128]{1,0:T(1,128)}', space=vmem, size = 0x12000, scoped, tag = 'internal scratch']
  #allocation2 [shape = 'f32[1,1]{1,0:T(1,128)S(6)}', space=smem, size = 0x200, scoped, tag = 'scoped memory for tpu_custom_call.1']
  %s0 = inlined_call_operand.hbm [shape: f32[56,1024], index: 0, kind: input, shape index: {}]
  %s1 = inlined_call_operand.vmem [shape: bf16[56,56], index: 1, kind: input, shape index: {}]
  %s2 = inlined_call_operand.vmem [shape: f32[56,1], index: 2, kind: input, shape index: {}]
  %s3 = inlined_call_operand.vmem [shape: bf16[8,56], index: 3, kind: input, shape index: {}]
  %s4 = inlined_call_operand.vmem [shape: f32[8,1], index: 4, kind: input, shape index: {}]
  %s5 = inlined_call_operand.vmem [shape: f32[8,1], index: 5, kind: input, shape index: {}]
  %s6 = inlined_call_operand.<no memory space> [shape: f32[1,1], index: 6, kind: input, shape index: {}]
  %s7 = inlined_call_operand.hbm [shape: f32[1,1024], index: 7, kind: output, shape index: {}]
  %s8 = sld [smem:[#allocation0]]
  $region65: #{tpu_custom_call.1} parent=0
    _
  %s10 = ssub.s32 1, %s8
  %s11 = scalar_select 0, %s10, %s8
  %12 = sst [smem:[#allocation2]] %s6
  $region1: #{tpu_custom_call.1} parent=0
    #allocation3 [shape = 'u8[114688]{0}', space=vmem, size = 0x1c000, scoped, tag = 'input window, operand 0']
    #allocation4 [shape = 's32[2]{0}', space=sflag, size = 0x8, scoped, tag = 'scoped memory for tpu_custom_call.1']
    #allocation5 [shape = 's32[2]{0}', space=sflag, size = 0x8, scoped, tag = 'scoped memory for tpu_custom_call.1']
    #allocation6 [shape = 'u8[2048]{0}', space=vmem, size = 0x800, scoped, tag = 'output window, operand 0']
    %13 = vsyncpa [#allocation4], 0
    %s14 = scalar_lea.sflag [#allocation4], 1
    %15 = vsyncpa %s14, 0
    %16 = vsyncpa [#allocation5], 0
    %s17 = scalar_lea.sflag [#allocation5], 1
    %18 = vsyncpa %s17, 0
    loop: start=0, step=1, limit=6
    $region2: #{tpu_custom_call.1} parent=1 // loop_pre_header
      _
    $region3: #{tpu_custom_call.1} parent=1 // loop_header
      %s20 = sphi 0, %s24
      %p21 = scmp.ge.s32.totalorder %s20, 6
      %s30 = sphi 0, %s32
      %s33 = sphi 0, %s30
      %s34 = sphi 0, %s33
      %s50 = sphi 0, %s34
      %s54 = sphi 0, %s54
      %s56 = sphi 0, %s54
      %s57 = sphi 0, %s56
      %s71 = sphi 0, %s57
      %s75 = sphi 0, %s75
      %s77 = sphi 0, %s75
      %s78 = sphi 0, %s77
      %s92 = sphi 0, %s78
      %s96 = sphi 0, %s96
      %s98 = sphi 0, %s96
      %s99 = sphi 0, %s98
      %s113 = sphi 0, %s99
      %s117 = sphi 0, %s117
      %s119 = sphi 0, %s117
      %s120 = sphi 0, %s119
      %s134 = sphi 0, %s120
      %s138 = sphi 0, %s138
      %s140 = sphi 0, %s138
      %s141 = sphi 0, %s140
      %s155 = sphi 0, %s141
      %s159 = sphi 0, %s159
      %s161 = sphi 0, %s159
      %s162 = sphi 0, %s161
      %s176 = sphi 0, %s162
      %s182 = sphi 0, %s184
      %s185 = sphi 0, %s182
      %s186 = sphi 0, %s185
      %s202 = sphi 0, %s186
    $region4: #{tpu_custom_call.1} parent=1 // loop_header_branch
      %23 = sbr.rel (%p21) target = $region8
    $region5: #{tpu_custom_call.1} parent=1 // loop_body
      %s25 = ssub.s32 %s20, 1
      %s26 = ssub.s32 %s20, 2
      %s27 = sadd.s32 %s20, 1
      %s28 = ssub.s32 %s20, %s27
      %p29 = scmp.eq.s32.totalorder %s28, 0
      %s31 = sadd.s32 %s30, 1
      %s32 = scalar_select %p29, %s30, %s31
      %p35 = pneg %p29
      %p36 = scmp.eq.s32.totalorder %s20, 3
      %p37 = por %p35, %p36
      %p38 = scmp.ne.s32.totalorder %s30, %s33
      %p39 = scmp.eq.s32.totalorder %s20, 0
      %p40 = por %p38, %p39
      %p41 = scmp.ne.s32.totalorder %s30, %s33
      %p42 = scmp.eq.s32.totalorder %s25, 3
      %p43 = por %p41, %p42
      %p44 = scmp.ne.s32.totalorder %s33, %s34
      %p45 = scmp.eq.s32.totalorder %s25, 0
      %p46 = por %p44, %p45
      %p47 = scmp.ne.s32.totalorder %s33, %s34
      %p48 = scmp.eq.s32.totalorder %s26, 3
      %p49 = por %p47, %p48
      %p51 = scmp.ne.s32.totalorder %s34, %s50
      %p52 = scmp.eq.s32.totalorder %s26, 0
      %p53 = por %p51, %p52
      %s55 = sadd.s32 %s54, 1
      %p58 = scmp.eq.s32.totalorder %s20, 3
      %p59 = scmp.ne.s32.totalorder %s54, %s56
      %p60 = scmp.eq.s32.totalorder %s20, 0
      %p61 = por %p59, %p60
      %p62 = scmp.ne.s32.totalorder %s54, %s56
      %p63 = scmp.eq.s32.totalorder %s25, 3
      %p64 = por %p62, %p63
      %p65 = scmp.ne.s32.totalorder %s56, %s57
      %p66 = scmp.eq.s32.totalorder %s25, 0
      %p67 = por %p65, %p66
      %p68 = scmp.ne.s32.totalorder %s56, %s57
      %p69 = scmp.eq.s32.totalorder %s26, 3
      %p70 = por %p68, %p69
      %p72 = scmp.ne.s32.totalorder %s57, %s71
      %p73 = scmp.eq.s32.totalorder %s26, 0
      %p74 = por %p72, %p73
      %s76 = sadd.s32 %s75, 1
      %p79 = scmp.eq.s32.totalorder %s20, 3
      %p80 = scmp.ne.s32.totalorder %s75, %s77
      %p81 = scmp.eq.s32.totalorder %s20, 0
      %p82 = por %p80, %p81
      %p83 = scmp.ne.s32.totalorder %s75, %s77
      %p84 = scmp.eq.s32.totalorder %s25, 3
      %p85 = por %p83, %p84
      %p86 = scmp.ne.s32.totalorder %s77, %s78
      %p87 = scmp.eq.s32.totalorder %s25, 0
      %p88 = por %p86, %p87
      %p89 = scmp.ne.s32.totalorder %s77, %s78
      %p90 = scmp.eq.s32.totalorder %s26, 3
      %p91 = por %p89, %p90
      %p93 = scmp.ne.s32.totalorder %s78, %s92
      %p94 = scmp.eq.s32.totalorder %s26, 0
      %p95 = por %p93, %p94
      %s97 = sadd.s32 %s96, 1
      %p100 = scmp.eq.s32.totalorder %s20, 3
      %p101 = scmp.ne.s32.totalorder %s96, %s98
      %p102 = scmp.eq.s32.totalorder %s20, 0
      %p103 = por %p101, %p102
      %p104 = scmp.ne.s32.totalorder %s96, %s98
      %p105 = scmp.eq.s32.totalorder %s25, 3
      %p106 = por %p104, %p105
      %p107 = scmp.ne.s32.totalorder %s98, %s99
      %p108 = scmp.eq.s32.totalorder %s25, 0
      %p109 = por %p107, %p108
      %p110 = scmp.ne.s32.totalorder %s98, %s99
      %p111 = scmp.eq.s32.totalorder %s26, 3
      %p112 = por %p110, %p111
      %p114 = scmp.ne.s32.totalorder %s99, %s113
      %p115 = scmp.eq.s32.totalorder %s26, 0
      %p116 = por %p114, %p115
      %s118 = sadd.s32 %s117, 1
      %p121 = scmp.eq.s32.totalorder %s20, 3
      %p122 = scmp.ne.s32.totalorder %s117, %s119
      %p123 = scmp.eq.s32.totalorder %s20, 0
      %p124 = por %p122, %p123
      %p125 = scmp.ne.s32.totalorder %s117, %s119
      %p126 = scmp.eq.s32.totalorder %s25, 3
      %p127 = por %p125, %p126
      %p128 = scmp.ne.s32.totalorder %s119, %s120
      %p129 = scmp.eq.s32.totalorder %s25, 0
      %p130 = por %p128, %p129
      %p131 = scmp.ne.s32.totalorder %s119, %s120
      %p132 = scmp.eq.s32.totalorder %s26, 3
      %p133 = por %p131, %p132
      %p135 = scmp.ne.s32.totalorder %s120, %s134
      %p136 = scmp.eq.s32.totalorder %s26, 0
      %p137 = por %p135, %p136
      %s139 = sadd.s32 %s138, 1
      %p142 = scmp.eq.s32.totalorder %s20, 3
      %p143 = scmp.ne.s32.totalorder %s138, %s140
      %p144 = scmp.eq.s32.totalorder %s20, 0
      %p145 = por %p143, %p144
      %p146 = scmp.ne.s32.totalorder %s138, %s140
      %p147 = scmp.eq.s32.totalorder %s25, 3
      %p148 = por %p146, %p147
      %p149 = scmp.ne.s32.totalorder %s140, %s141
      %p150 = scmp.eq.s32.totalorder %s25, 0
      %p151 = por %p149, %p150
      %p152 = scmp.ne.s32.totalorder %s140, %s141
      %p153 = scmp.eq.s32.totalorder %s26, 3
      %p154 = por %p152, %p153
      %p156 = scmp.ne.s32.totalorder %s141, %s155
      %p157 = scmp.eq.s32.totalorder %s26, 0
      %p158 = por %p156, %p157
      %s160 = sadd.s32 %s159, 1
      %p163 = scmp.eq.s32.totalorder %s20, 3
      %p164 = scmp.ne.s32.totalorder %s159, %s161
      %p165 = scmp.eq.s32.totalorder %s20, 0
      %p166 = por %p164, %p165
      %p167 = scmp.ne.s32.totalorder %s159, %s161
      %p168 = scmp.eq.s32.totalorder %s25, 3
      %p169 = por %p167, %p168
      %p170 = scmp.ne.s32.totalorder %s161, %s162
      %p171 = scmp.eq.s32.totalorder %s25, 0
      %p172 = por %p170, %p171
      %p173 = scmp.ne.s32.totalorder %s161, %s162
      %p174 = scmp.eq.s32.totalorder %s26, 3
      %p175 = por %p173, %p174
      %p177 = scmp.ne.s32.totalorder %s162, %s176
      %p178 = scmp.eq.s32.totalorder %s26, 0
      %p179 = por %p177, %p178
      %s180 = ssub.s32 %s20, %s27
      %p181 = scmp.eq.s32.totalorder %s180, 0
      %s183 = sadd.s32 %s182, 1
      %s184 = scalar_select %p181, %s182, %s183
      %p187 = pneg %p181
      %p188 = scmp.eq.s32.totalorder %s20, 3
      %p189 = por %p187, %p188
      %p190 = scmp.ne.s32.totalorder %s182, %s185
      %p191 = scmp.eq.s32.totalorder %s20, 0
      %p192 = por %p190, %p191
      %p193 = scmp.ne.s32.totalorder %s182, %s185
      %p194 = scmp.eq.s32.totalorder %s25, 3
      %p195 = por %p193, %p194
      %p196 = scmp.ne.s32.totalorder %s185, %s186
      %p197 = scmp.eq.s32.totalorder %s25, 0
      %p198 = por %p196, %p197
      %p199 = scmp.ne.s32.totalorder %s185, %s186
      %p200 = scmp.eq.s32.totalorder %s26, 3
      %p201 = por %p199, %p200
      %p203 = scmp.ne.s32.totalorder %s186, %s202
      %p204 = scmp.eq.s32.totalorder %s26, 0
      %p205 = por %p203, %p204
      %p206 = scmp.le.s32.totalorder 1, %s20
      %p207 = scmp.lt.s32.totalorder %s20, 5
      %p208 = pnand %p206, %p207
      %p209 = pneg %p208
      // Predicated region
      $region9: #{tpu_custom_call.1} parent=5 // pred_check
        _
      $region10: #{tpu_custom_call.1} parent=5 // pred_check_branch
        %211 = sbr.rel (%p208) target = $region12
      $region11: #{tpu_custom_call.1} parent=5 // pred_region
        %s212 = ssub.s32 %s20, 1
        // Predicated region
        $region13: #{tpu_custom_call.1} parent=11 // pred_check
          %p213 = pneg %p67
        $region14: #{tpu_custom_call.1} parent=11 // pred_check_branch
          %215 = sbr.rel (%p213) target = $region16
        $region15: #{tpu_custom_call.1} parent=11 // pred_region
          _
        $region16: #{tpu_custom_call.1} parent=11 // pred_fallthru
          _
        // Predicated region
        $region17: #{tpu_custom_call.1} parent=11 // pred_check
          %p216 = pneg %p88
        $region18: #{tpu_custom_call.1} parent=11 // pred_check_branch
          %218 = sbr.rel (%p216) target = $region20
        $region19: #{tpu_custom_call.1} parent=11 // pred_region
          _
        $region20: #{tpu_custom_call.1} parent=11 // pred_fallthru
          _
        // Predicated region
        $region21: #{tpu_custom_call.1} parent=11 // pred_check
          %p219 = pneg %p109
        $region22: #{tpu_custom_call.1} parent=11 // pred_check_branch
          %221 = sbr.rel (%p219) target = $region24
        $region23: #{tpu_custom_call.1} parent=11 // pred_region
          _
        $region24: #{tpu_custom_call.1} parent=11 // pred_fallthru
          _
        // Predicated region
        $region25: #{tpu_custom_call.1} parent=11 // pred_check
          %p222 = pneg %p130
        $region26: #{tpu_custom_call.1} parent=11 // pred_check_branch
          %224 = sbr.rel (%p222) target = $region28
        $region27: #{tpu_custom_call.1} parent=11 // pred_region
          _
        $region28: #{tpu_custom_call.1} parent=11 // pred_fallthru
          _
        // Predicated region
        $region29: #{tpu_custom_call.1} parent=11 // pred_check
          %p225 = pneg %p151
        $region30: #{tpu_custom_call.1} parent=11 // pred_check_branch
          %227 = sbr.rel (%p225) target = $region32
        $region31: #{tpu_custom_call.1} parent=11 // pred_region
          _
        $region32: #{tpu_custom_call.1} parent=11 // pred_fallthru
          _
        // Predicated region
        $region33: #{tpu_custom_call.1} parent=11 // pred_check
          %p228 = pneg %p172
        $region34: #{tpu_custom_call.1} parent=11 // pred_check_branch
          %230 = sbr.rel (%p228) target = $region36
        $region35: #{tpu_custom_call.1} parent=11 // pred_region
          _
        $region36: #{tpu_custom_call.1} parent=11 // pred_fallthru
          _
      $region12: #{tpu_custom_call.1} parent=5 // pred_fallthru
        _
      %p231 = scmp.lt.s32.totalorder %s20, 4
      // Predicated region
      $region37: #{tpu_custom_call.1} parent=5 // pred_check
        %p232 = pneg %p231
      $region38: #{tpu_custom_call.1} parent=5 // pred_check_branch
        %234 = sbr.rel (%p232) target = $region40
      $region39: #{tpu_custom_call.1} parent=5 // pred_region
        // Predicated region
        $region41: #{tpu_custom_call.1} parent=39 // pred_check
          %p235 = pneg %p40
        $region42: #{tpu_custom_call.1} parent=39 // pred_check_branch
          %237 = sbr.rel (%p235) target = $region44
        $region43: #{tpu_custom_call.1} parent=39 // pred_region
          %s238 = sand.u32 %s30, 1
          %s239 = scalar_lea.sflag [#allocation4], %s238
          %s240 = sand.u32 %s30, 1
          %s241 = smul.addr %s240, 112
          %s242 = scalar_lea.vmem [#allocation3], %s241
          %s243 = smul.u32 2, %s20
          %s245 = ssub.s32 1792, 1792
          %246 = vsyncadd %s239, %s245
          %s247 = smul.addr %s243, 128
          %s248 = scalar_lea.hbm %s0, %s247
          %s249 = sshll.u32 %s242, 4
          %s250 = int_to_ptr.vmem [resolvable:$true] %s249
          %255 = dma.hbm_to_vmem [thread:$0]  %s248, 1792, %s250, %s239, 1024, 256, 16
        $region44: #{tpu_custom_call.1} parent=39 // pred_fallthru
          _
      $region40: #{tpu_custom_call.1} parent=5 // pred_fallthru
        _
      %p256 = scmp.le.s32.totalorder 1, %s20
      %p257 = scmp.lt.s32.totalorder %s20, 5
      %p258 = pnand %p256, %p257
      %p259 = pneg %p258
      // Predicated region
      $region45: #{tpu_custom_call.1} parent=5 // pred_check
        _
      $region46: #{tpu_custom_call.1} parent=5 // pred_check_branch
        %261 = sbr.rel (%p258) target = $region48
      $region47: #{tpu_custom_call.1} parent=5 // pred_region
        %s262 = ssub.s32 %s20, 1
        %s263 = sand.u32 %s33, 1
        %s264 = scalar_lea.sflag [#allocation4], %s263
        %s265 = sand.u32 %s33, 1
        %s266 = smul.addr %s265, 112
        %s267 = scalar_lea.vmem [#allocation3], %s266
        // Predicated region
        $region49: #{tpu_custom_call.1} parent=47 // pred_check
          %p268 = pneg %p46
        $region50: #{tpu_custom_call.1} parent=47 // pred_check_branch
          %270 = sbr.rel (%p268) target = $region52
        $region51: #{tpu_custom_call.1} parent=47 // pred_region
          %271 = dma.done %s264, 1792
        $region52: #{tpu_custom_call.1} parent=47 // pred_fallthru
          _
        %s272 = sand.u32 %s33, 1
        %s273 = scalar_lea.sflag [#allocation4], %s272
        %s274 = sand.u32 %s33, 1
        %s275 = smul.addr %s274, 112
        %s276 = scalar_lea.vmem [#allocation3], %s275
        %p277 = pneg %p46
        %p278 = pneg %p43
        %p279 = pneg %p67
        %p280 = pneg %p64
        %p281 = pneg %p88
        %p282 = pneg %p85
        %p283 = pneg %p109
        %p284 = pneg %p106
        %p285 = pneg %p130
        %p286 = pneg %p127
        %p287 = pneg %p151
        %p288 = pneg %p148
        %p289 = pneg %p172
        %p290 = pneg %p169
        %p291 = pneg %p198
        %p292 = pneg %p195
        %s293 = sand.u32 %s185, 1
        %s294 = scalar_lea.sflag [#allocation5], %s293
        %s295 = sand.u32 %s185, 1
        %s296 = smul.addr %s295, 2
        %s297 = scalar_lea.vmem [#allocation6], %s296
        %s298 = smul.u32 2, %s25
        %s299 = smul.u32 2, %s25
        %v301 = vld [vmem:[%s267] sm:$0xff]
        %v302 = vld [vmem:[%s267 + $0x8] sm:$0xff]
        %v303 = vld [vmem:[%s267 + $0x10] sm:$0xff]
        %v304 = vld [vmem:[%s267 + $0x18] sm:$0xff]
        %v305 = vld [vmem:[%s267 + $0x20] sm:$0xff]
        %v306 = vld [vmem:[%s267 + $0x28] sm:$0xff]
        %v307 = vld [vmem:[%s267 + $0x30] sm:$0xff]
        %v308 = vld [vmem:[%s267 + $0x38] sm:$0xff]
        %v309 = vld [vmem:[%s267 + $0x40] sm:$0xff]
        %v310 = vld [vmem:[%s267 + $0x48] sm:$0xff]
        %v311 = vld [vmem:[%s267 + $0x50] sm:$0xff]
        %v312 = vld [vmem:[%s267 + $0x58] sm:$0xff]
        %v313 = vld [vmem:[%s267 + $0x60] sm:$0xff]
        %v314 = vld [vmem:[%s267 + $0x68] sm:$0xff]
        %v315 = vpack.c.bf16 %v303, %v301
        %v316 = vpack.c.bf16 %v304, %v302
        %v317 = vpack.c.bf16 %v307, %v305
        %v318 = vpack.c.bf16 %v308, %v306
        %v319 = vpack.c.bf16 %v311, %v309
        %v320 = vpack.c.bf16 %v312, %v310
        %v321 = vpack.c.bf16 %v313, %v313
        %v322 = vpack.c.bf16 %v314, %v314
        %v323 = vld [vmem:[%s1] sm:$0xf]
        %v324 = vld [vmem:[%s1 + $0x4] sm:$0xf]
        %v325 = vld [vmem:[%s1 + $0x8] sm:$0xf]
        %v326 = vld [vmem:[%s1 + $0xc] sm:$0xf]
        %v327 = vld [vmem:[%s1 + $0x10] sm:$0xf]
        %v328 = vld [vmem:[%s1 + $0x14] sm:$0xf]
        %v329 = vld [vmem:[%s1 + $0x18] sm:$0xf]
        %v330 = vld [vmem:[%s2] sm:$0xff]
        %v331 = vld [vmem:[%s2 + $0x8] sm:$0xff]
        %v332 = vld [vmem:[%s2 + $0x10] sm:$0xff]
        %v333 = vld [vmem:[%s2 + $0x18] sm:$0xff]
        %v334 = vld [vmem:[%s2 + $0x20] sm:$0xff]
        %v335 = vld [vmem:[%s2 + $0x28] sm:$0xff]
        %v336 = vld [vmem:[%s2 + $0x30] sm:$0xff]
        %338 = vset.pattern.permute.xlu0 0
        %339 = vperm.xlu0 %338, %v330
        %v340 = vpop.permute.xlu0 %339
        %343 = vset.pattern.permute.xlu0 0
        %344 = vperm.xlu0 %343, %v331
        %v345 = vpop.permute.xlu0 %344
        %348 = vset.pattern.permute.xlu0 0
        %349 = vperm.xlu0 %348, %v332
        %v350 = vpop.permute.xlu0 %349
        %353 = vset.pattern.permute.xlu0 0
        %354 = vperm.xlu0 %353, %v333
        %v355 = vpop.permute.xlu0 %354
        %358 = vset.pattern.permute.xlu0 0
        %359 = vperm.xlu0 %358, %v334
        %v360 = vpop.permute.xlu0 %359
        %363 = vset.pattern.permute.xlu0 0
        %364 = vperm.xlu0 %363, %v335
        %v365 = vpop.permute.xlu0 %364
        %368 = vset.pattern.permute.xlu0 0
        %369 = vperm.xlu0 %368, %v336
        %v370 = vpop.permute.xlu0 %369
        %v379 = vunpack.c.l.b16 %v323
        %v380 = vunpack.c.l.b16 %v324
        %v381 = vunpack.c.l.b16 %v325
        %v382 = vunpack.c.l.b16 %v326
        %v383 = vunpack.c.l.b16 %v327
        %v384 = vunpack.c.l.b16 %v328
        %v385 = vunpack.c.l.b16 %v329
        %v386 = vpack.c.b16 %v380, %v379
        %v387 = vpack.c.b16 %v382, %v381
        %v388 = vpack.c.b16 %v384, %v383
        %v389 = vpack.c.b16 %v385, %v385
        %vm390 = vcmask 457728
        %v392 = vsel %vm390, %v386, 0
        %v395 = vsel %vm390, %v387, 0
        %v398 = vsel %vm390, %v388, 0
        %v401 = vsel %vm390, %v389, 0
        %vm403 = vcmask 1043456
        %v405 = vsel %vm403, %v321, 0
        %v408 = vsel %vm403, %v322, 0
        %410 = vmatprep.subr.bf16.mxu0 %v316
        %411 = vmatpush1.bf16.msra.mxu0 %v315
        %412 = vmatprep.subr.bf16.mxu0 %v318
        %413 = vmatpush1.bf16.msra.mxu0 %v317
        %414 = vmatprep.subr.bf16.mxu0 %v320
        %415 = vmatpush1.bf16.msra.mxu0 %v319
        %416 = vmatprep.subr.bf16.mxu0 %v408
        %417 = vmatpush1.bf16.msra.mxu0 %v405
        %418 = vmatprep.subr.bf16.mxu0 0
        %419 = vmatpush1.bf16.msra.mxu0 0
        %420 = vmatprep.subr.bf16.mxu0 0
        %421 = vmatpush1.bf16.msra.mxu0 0
        %422 = vmatprep.subr.bf16.mxu0 0
        %423 = vmatpush1.bf16.msra.mxu0 0
        %424 = vmatprep.subr.bf16.mxu0 0
        %425 = vmatpush1.bf16.msra.mxu0 0
        %426 = vmatprep.subr.bf16.mxu0 0
        %427 = vmatpush1.bf16.msra.mxu0 0
        %428 = vmatprep.subr.bf16.mxu0 0
        %429 = vmatpush1.bf16.msra.mxu0 0
        %430 = vmatprep.subr.bf16.mxu0 0
        %431 = vmatpush1.bf16.msra.mxu0 0
        %432 = vmatprep.subr.bf16.mxu0 0
        %433 = vmatpush1.bf16.msra.mxu0 0
        %434 = vmatprep.subr.bf16.mxu0 0
        %435 = vmatpush1.bf16.msra.mxu0 0
        %436 = vmatprep.subr.bf16.mxu0 0
        %437 = vmatpush1.bf16.msra.mxu0 0
        %438 = vmatprep.subr.bf16.mxu0 0
        %439 = vmatpush1.bf16.msra.mxu0 0
        %440 = vmatprep.subr.bf16.mxu0 0
        %441 = vmatpush1.bf16.msra.mxu0 0
        %442 = vmatprep.mubr.bf16.mxu0 0
        %443 = vmatmul.mubr.bf16.gmra.mrb[0].mxu0 %v392
        %v444 = vpop.f32.mrb[0].mxu0
        %v445 = vadd.f32 %v340, %v444
        %v446 = vpop.f32.mrb[0].mxu0
        %v447 = vadd.f32 %v340, %v446
        %v448 = vpop.f32.mrb[0].mxu0
        %v449 = vadd.f32 %v345, %v448
        %v450 = vpop.f32.mrb[0].mxu0
        %v451 = vadd.f32 %v345, %v450
        %452 = vmatprep.mubr.bf16.mxu0 0
        %453 = vmatmul.mubr.bf16.gmra.mrb[0].mxu0 %v395
        %v454 = vpop.f32.mrb[0].mxu0
        %v455 = vadd.f32 %v350, %v454
        %v456 = vpop.f32.mrb[0].mxu0
        %v457 = vadd.f32 %v350, %v456
        %v458 = vpop.f32.mrb[0].mxu0
        %v459 = vadd.f32 %v355, %v458
        %v460 = vpop.f32.mrb[0].mxu0
        %v461 = vadd.f32 %v355, %v460
        %462 = vmatprep.mubr.bf16.mxu0 0
        %463 = vmatmul.mubr.bf16.gmra.mrb[0].mxu0 %v398
        %v464 = vpop.f32.mrb[0].mxu0
        %v465 = vadd.f32 %v360, %v464
        %v466 = vpop.f32.mrb[0].mxu0
        %v467 = vadd.f32 %v360, %v466
        %v468 = vpop.f32.mrb[0].mxu0
        %v469 = vadd.f32 %v365, %v468
        %v470 = vpop.f32.mrb[0].mxu0
        %v471 = vadd.f32 %v365, %v470
        %472 = vmatprep.mubr.bf16.mxu0 0
        %473 = vmatmul.mubr.bf16.gmra.mrb[0].mxu0 %v401
        %v474 = vpop.f32.mrb[0].mxu0
        %v475 = vadd.f32 %v370, %v474
        %v476 = vpop.f32.mrb[0].mxu0
        %v477 = vadd.f32 %v370, %v476
        %v478 = vpop.f32.mrb[0].mxu0
        %v479 = vpop.f32.mrb[0].mxu0
        %480 = vdwg.mxu0
        %v481 = vmax.f32 %v445, 0.0
        %v482 = vmax.f32 %v447, 0.0
        %v483 = vmax.f32 %v449, 0.0
        %v484 = vmax.f32 %v451, 0.0
        %v485 = vmax.f32 %v455, 0.0
        %v486 = vmax.f32 %v457, 0.0
        %v487 = vmax.f32 %v459, 0.0
        %v488 = vmax.f32 %v461, 0.0
        %v489 = vmax.f32 %v465, 0.0
        %v490 = vmax.f32 %v467, 0.0
        %v491 = vmax.f32 %v469, 0.0
        %v492 = vmax.f32 %v471, 0.0
        %v493 = vmax.f32 %v475, 0.0
        %v494 = vmax.f32 %v477, 0.0
        %v495 = vld [vmem:[%s3] sm:$0xf]
        %v496 = vpack.c.bf16 %v483, %v481
        %v497 = vpack.c.bf16 %v484, %v482
        %v498 = vpack.c.bf16 %v487, %v485
        %v499 = vpack.c.bf16 %v488, %v486
        %v500 = vpack.c.bf16 %v491, %v489
        %v501 = vpack.c.bf16 %v492, %v490
        %v502 = vpack.c.bf16 %v493, %v493
        %v503 = vpack.c.bf16 %v494, %v494
        %v504 = vld [vmem:[%s4] sm:$0xff]
        %506 = vset.pattern.permute.xlu0 0
        %507 = vperm.xlu0 %506, %v504
        %v508 = vpop.permute.xlu0 %507
        %v511 = vsel %vm390, %v495, 0
        %v514 = vsel %vm403, %v502, 0
        %v517 = vsel %vm403, %v503, 0
        %519 = vmatprep.subr.bf16.mxu0 %v497
        %520 = vmatpush1.bf16.msra.mxu0 %v496
        %521 = vmatprep.subr.bf16.mxu0 %v499
        %522 = vmatpush1.bf16.msra.mxu0 %v498
        %523 = vmatprep.subr.bf16.mxu0 %v501
        %524 = vmatpush1.bf16.msra.mxu0 %v500
        %525 = vmatprep.subr.bf16.mxu0 %v517
        %526 = vmatpush1.bf16.msra.mxu0 %v514
        %527 = vmatprep.subr.bf16.mxu0 0
        %528 = vmatpush1.bf16.msra.mxu0 0
        %529 = vmatprep.subr.bf16.mxu0 0
        %530 = vmatpush1.bf16.msra.mxu0 0
        %531 = vmatprep.subr.bf16.mxu0 0
        %532 = vmatpush1.bf16.msra.mxu0 0
        %533 = vmatprep.subr.bf16.mxu0 0
        %534 = vmatpush1.bf16.msra.mxu0 0
        %535 = vmatprep.subr.bf16.mxu0 0
        %536 = vmatpush1.bf16.msra.mxu0 0
        %537 = vmatprep.subr.bf16.mxu0 0
        %538 = vmatpush1.bf16.msra.mxu0 0
        %539 = vmatprep.subr.bf16.mxu0 0
        %540 = vmatpush1.bf16.msra.mxu0 0
        %541 = vmatprep.subr.bf16.mxu0 0
        %542 = vmatpush1.bf16.msra.mxu0 0
        %543 = vmatprep.subr.bf16.mxu0 0
        %544 = vmatpush1.bf16.msra.mxu0 0
        %545 = vmatprep.subr.bf16.mxu0 0
        %546 = vmatpush1.bf16.msra.mxu0 0
        %547 = vmatprep.subr.bf16.mxu0 0
        %548 = vmatpush1.bf16.msra.mxu0 0
        %549 = vmatprep.subr.bf16.mxu0 0
        %550 = vmatpush1.bf16.msra.mxu0 0
        %551 = vmatprep.mubr.bf16.mxu0 0
        %552 = vmatmul.mubr.bf16.gmra.mrb[0].mxu0 %v511
        %v553 = vpop.f32.mrb[0].mxu0
        %v554 = vadd.f32 %v508, %v553
        %v555 = vpop.f32.mrb[0].mxu0
        %v556 = vadd.f32 %v508, %v555
        %v557 = vpop.f32.mrb[0].mxu0
        %v558 = vpop.f32.mrb[0].mxu0
        %559 = vdwg.mxu0
        %v560 = vmax.f32 %v554, 0.0
        %v561 = vmax.f32 %v556, 0.0
        %v562 = vld [vmem:[%s5] sm:$0xff]
        %564 = vset.pattern.permute.xlu0 0
        %565 = vperm.xlu0 %564, %v562
        %v566 = vpop.permute.xlu0 %565
        %v568 = vmul.f32 %v560, %v566
        %v569 = vmul.f32 %v561, %v566
        %v570 = vrot.slane %v568, 4
        %v571 = vadd.f32 %v568, %v570
        %v572 = vrot.slane %v571, 2
        %v573 = vadd.f32 %v571, %v572
        %v574 = vrot.slane %v573, 1
        %v575 = vadd.f32 %v573, %v574
        %v576 = vrot.slane %v569, 4
        %v577 = vadd.f32 %v569, %v576
        %v578 = vrot.slane %v577, 2
        %v579 = vadd.f32 %v577, %v578
        %v580 = vrot.slane %v579, 1
        %v581 = vadd.f32 %v579, %v580
        %s582 = sld [smem:[#allocation2]]
        %v583 = vstv %s582
        %v584 = vadd.f32 %v575, %v583
        %v585 = vadd.f32 %v581, %v583
        %v586 = vxor.u32 %v584, 2147483648
        %v587 = vxor.u32 %v585, 2147483648
        %v588 = vmul.f32 %v586, 1.442695
        %v589 = vpow.pop %v588
        %v590 = vmul.f32 %v587, 1.442695
        %v591 = vpow.pop %v590
        %v592 = vadd.f32 %v589, 1.0
        %v593 = vadd.f32 %v591, 1.0
        %v594 = vrcp.pop %v592
        %v595 = vmul.f32 1.0, %v594
        %v596 = vrcp.pop %v593
        %v597 = vmul.f32 1.0, %v596
        %v600 = vcombine.low %v595, %v597
        %v602 = vunpack.c.l.s4 1966171168
        %v603 = vunpack.c.0.s8 %v602
        %v604 = vlaneseq
        %v605 = vshrl.u32 %v604, 7
        %v606 = vsub.s32 %v603, %v605
        %v607 = vrot.slane %v600, %v606
        %v609 = vunpack.c.l.s4 1966171168
        %v610 = vunpack.c.0.s8 %v609
        %v611 = vlaneseq
        %v612 = vshrl.u32 %v611, 7
        %v613 = vsub.s32 %v610, %v612
        %v614 = vrot.slane %v607, %v613
        %v616 = vlaneseq
        %vm617 = vcmp.ge.s32.totalorder %v616, 0
        %vm618 = vcmp.lt.s32.totalorder %v616, 256
        %vm619 = vmand %vm617, %vm618
        %620 = vst.msk [vmem:[%s297] sm:$0x3] %vm619, %v614
        %s621 = sand.u32 %s185, 1
        %s622 = scalar_lea.sflag [#allocation5], %s621
        %s623 = sand.u32 %s185, 1
        %s624 = smul.addr %s623, 2
        %s625 = scalar_lea.vmem [#allocation6], %s624
        // Predicated region
        $region53: #{tpu_custom_call.1} parent=47 // pred_check
          %p626 = pneg %p195
        $region54: #{tpu_custom_call.1} parent=47 // pred_check_branch
          %628 = sbr.rel (%p626) target = $region56
        $region55: #{tpu_custom_call.1} parent=47 // pred_region
          %s629 = smul.u32 2, %s25
          %s631 = ssub.s32 32, 32
          %632 = vsyncadd %s622, %s631
          %s633 = smul.addr %s629, 16
          %s634 = scalar_lea.hbm %s7, %s633
          %s636 = sshll.u32 %s625, 4
          %s637 = int_to_ptr.vmem [resolvable:$true] %s636
          %639 = dma.vmem_to_hbm [thread:$0]  %s637, 32, %s634, %s622
        $region56: #{tpu_custom_call.1} parent=47 // pred_fallthru
          _
      $region48: #{tpu_custom_call.1} parent=5 // pred_fallthru
        _
      %p640 = scmp.le.s32.totalorder 2, %s20
      // Predicated region
      $region57: #{tpu_custom_call.1} parent=5 // pred_check
        %p641 = pneg %p640
      $region58: #{tpu_custom_call.1} parent=5 // pred_check_branch
        %643 = sbr.rel (%p641) target = $region60
      $region59: #{tpu_custom_call.1} parent=5 // pred_region
        %s644 = ssub.s32 %s20, 2
        // Predicated region
        $region61: #{tpu_custom_call.1} parent=59 // pred_check
          %p645 = pneg %p201
        $region62: #{tpu_custom_call.1} parent=59 // pred_check_branch
          %647 = sbr.rel (%p645) target = $region64
        $region63: #{tpu_custom_call.1} parent=59 // pred_region
          %s648 = sand.u32 %s186, 1
          %s649 = scalar_lea.sflag [#allocation5], %s648
          %s650 = sand.u32 %s186, 1
          %s651 = smul.addr %s650, 2
          %s652 = scalar_lea.vmem [#allocation6], %s651
          %653 = dma.done %s649, 32
        $region64: #{tpu_custom_call.1} parent=59 // pred_fallthru
          _
      $region60: #{tpu_custom_call.1} parent=5 // pred_fallthru
        _
    $region6: #{tpu_custom_call.1} parent=1 // loop_footer
      %s24 = sadd.s32 1, %s20
    $region7: #{tpu_custom_call.1} parent=1 // loop_footer_branch
      %19 = sbr.rel target = $region3
    $region8: #{tpu_custom_call.1} parent=1 // loop_exit
      _
    %654 = vsyncpa [#allocation4], 1
    %s655 = scalar_lea.sflag [#allocation4], 1
    %656 = vsyncpa %s655, 1
    %657 = vsyncpa [#allocation5], 1
    %s658 = scalar_lea.sflag [#allocation5], 1
    %659 = vsyncpa %s658, 1

</llo_original>
